<compile_context>
chip_gen: v7x
topology: tpu7x:2x2x1
jax: 0.10.0
libtpu: 0.0.40
codegen_flags: <defaults>
</compile_context>

<pallas_src>
import jax
import jax.numpy as jnp
from jax.experimental import pallas as pl
from jax.experimental.pallas import tpu as pltpu


def mlp_probe_kernel(x_ref, w1_ref, b1_ref, w2_ref, b2_ref, o_ref):
    # Layer 1: MXU matmul with f32 accumulation; bias + ReLU on the VPU.
    h = jnp.dot(x_ref[...], w1_ref[...], preferred_element_type=jnp.float32)
    h = jnp.maximum(h + b1_ref[...], 0.0)                 # (tb, H)

    # Layer 2 (output width 1): VPU multiply + lane reduction instead of an
    # MXU matmul that would use a single output column.
    o = jnp.sum(h * w2_ref[...], axis=-1)                 # (tb,)
    o = jax.nn.sigmoid(o + b2_ref[0])                     # scalar bias from SMEM

    # Lane-dense (1, tb) store (instead of a masked (tb, 1) column store).
    o_ref[...] = o[None, :].astype(o_ref.dtype)


def mlp_probe(x, w1, b1, w2, b2, *, tb=512, compute_dtype=None,
              vmem_limit_bytes=None):
    """x: (B, d); w1: (d, H); b1: (1, H) or (H,); w2: (H, 1) or (1, H); b2: scalar-like.

    Returns sigmoid(relu(x @ w1 + b1) @ w2 + b2) with shape (B, 1), float32.
    """
    B, d = x.shape
    H = w1.shape[1]

    # Normalize parameter layouts (f32 epilogue regardless of compute dtype).
    b1_row = jnp.reshape(b1, (1, H)).astype(jnp.float32)
    w2_row = jnp.reshape(w2, (1, H)).astype(jnp.float32)
    b2_s = jnp.reshape(b2, (1,)).astype(jnp.float32)

    # Optional reduced-precision matmul inputs (halves HBM traffic on x).
    if compute_dtype is not None:
        x = x.astype(compute_dtype)
        w1 = w1.astype(compute_dtype)

    # ---- Tile selection --------------------------------------------------
    # Lane-dense tile: tb is a multiple of 128.
    tb = max(128, (int(tb) // 128) * 128)

    # Cap tb so double-buffered x tiles fit the default scoped VMEM with headroom
    # on every generation (v7x has only 64 MiB of physical VMEM).
    itemsize = jnp.dtype(x.dtype).itemsize
    vmem_budget = 24 * 1024 * 1024
    max_tb = max(128, ((vmem_budget // (2 * d * itemsize)) // 128) * 128)
    tb = min(tb, max_tb)

    # Pad the batch so it divides evenly into tiles (tail handled by padding,
    # not by shrinking the tile).
    B_pad = pl.cdiv(B, 128) * 128
    if B_pad <= tb:
        tb = B_pad
    else:
        B_pad = pl.cdiv(B_pad, tb) * tb
    grid_n = B_pad // tb

    # v7x megacore: prefer >= 2 parallel grid steps when there is enough work.
    if grid_n == 1 and tb % 256 == 0:
        tb //= 2
        grid_n = 2

    if B_pad != B:
        x = jnp.pad(x, ((0, B_pad - B), (0, 0)))

    out = pl.pallas_call(
        mlp_probe_kernel,
        out_shape=jax.ShapeDtypeStruct((grid_n, tb), jnp.float32),
        grid_spec=pltpu.PrefetchScalarGridSpec(
            num_scalar_prefetch=0,
            grid=(grid_n,),
            in_specs=[
                pl.BlockSpec((tb, d), lambda i: (i, 0)),             # x batch tile
                pl.BlockSpec((d, H), lambda i: (0, 0)),              # W1 (resident)
                pl.BlockSpec((1, H), lambda i: (0, 0)),              # b1 (resident)
                pl.BlockSpec((1, H), lambda i: (0, 0)),              # w2 row (resident)
                pl.BlockSpec(memory_space=pltpu.MemorySpace.SMEM),   # b2 scalar
            ],
            out_specs=pl.BlockSpec((1, tb), lambda i: (i, 0)),       # lane-dense rows
        ),
        compiler_params=pltpu.CompilerParams(
            dimension_semantics=("parallel",),
            vmem_limit_bytes=vmem_limit_bytes,
        ),
    )(x, w1, b1_row, w2_row, b2_s)

    return out.reshape(B_pad, 1)[:B]


if __name__ == "__main__":
    # Small shapes consistent with the module: batch=16, d=32, hidden=32.
    B, d, H = 16, 32, 32

    key = jax.random.PRNGKey(0)
    kx, kw1, kb1, kw2, kb2 = jax.random.split(key, 5)

    x = jax.random.normal(kx, (B, d), dtype=jnp.float32)

    # Deterministic parameter init (uniform, fan-in scaled like nn.Linear default).
    lim1 = 1.0 / (d ** 0.5)
    w1 = jax.random.uniform(kw1, (d, H), minval=-lim1, maxval=lim1, dtype=jnp.float32)
    b1 = jax.random.uniform(kb1, (1, H), minval=-lim1, maxval=lim1, dtype=jnp.float32)
    lim2 = 1.0 / (H ** 0.5)
    w2 = jax.random.uniform(kw2, (H, 1), minval=-lim2, maxval=lim2, dtype=jnp.float32)
    b2 = jax.random.uniform(kb2, (1, 1), minval=-lim2, maxval=lim2, dtype=jnp.float32)

    # Pure-JAX reference.
    ref = jax.nn.sigmoid(jnp.maximum(x @ w1 + b1, 0.0) @ w2 + b2)

    # f32 path: exact semantics of the PyTorch module.
    out = jax.block_until_ready(mlp_probe(x, w1, b1, w2, b2, tb=512))
    assert out.shape == (B, 1)
    assert jnp.allclose(out, ref, atol=1e-5, rtol=1e-5)

    # bf16-input path (HBM-bandwidth optimization for large B); looser tolerance.
    out_bf16 = jax.block_until_ready(
        mlp_probe(x, w1, b1, w2, b2, tb=512, compute_dtype=jnp.bfloat16))
    assert out_bf16.shape == (B, 1)
    assert jnp.allclose(out_bf16, ref, atol=2e-2, rtol=2e-2)

    print("KERNEL_OK")
</pallas_src>

<mosaic_0001>
module attributes {stable_mosaic.version = 11 : i64} {
  func.func @mlp_probe_kernel(%arg0: i32, %arg1: memref<128x32xf32, #tpu.memory_space<vmem>>, %arg2: memref<32x32xf32, #tpu.memory_space<vmem>>, %arg3: memref<1x32xf32, #tpu.memory_space<vmem>>, %arg4: memref<1x32xf32, #tpu.memory_space<vmem>>, %arg5: memref<1xf32, #tpu.memory_space<smem>>, %arg6: memref<1x128xf32, #tpu.memory_space<vmem>>) attributes {dimension_semantics = [#tpu.dimension_semantics<parallel>], iteration_bounds = array<i64: 1>, scalar_prefetch = 0 : i64, scratch_operands = 0 : i64, tpu.core_type = #tpu.core_type<tc>, window_params = [{transform_indices = @transform_0, window_bounds = array<i64: 128, 32>}, {pipeline_mode = #tpu.pipeline_mode<synchronous>, transform_indices = @transform_1, window_bounds = array<i64: 32, 32>}, {pipeline_mode = #tpu.pipeline_mode<synchronous>, transform_indices = @transform_2, window_bounds = array<i64: 1, 32>}, {pipeline_mode = #tpu.pipeline_mode<synchronous>, transform_indices = @transform_3, window_bounds = array<i64: 1, 32>}, {transform_indices = @transform_4, window_bounds = array<i64: 1>}, {transform_indices = @transform_5, window_bounds = array<i64: 1, 128>}]} {
    %c0 = arith.constant 0 : index
    %c0_0 = arith.constant 0 : index
    %0 = vector.load %arg1[%c0, %c0_0] : memref<128x32xf32, #tpu.memory_space<vmem>>, vector<128x32xf32>
    %c0_1 = arith.constant 0 : index
    %c0_2 = arith.constant 0 : index
    %1 = vector.load %arg2[%c0_1, %c0_2] : memref<32x32xf32, #tpu.memory_space<vmem>>, vector<32x32xf32>
    %cst = arith.constant dense<0.000000e+00> : vector<128x32xf32>
    %2 = tpu.matmul %0, %1, %cst {dimension_numbers = #tpu.dot_dimension_numbers<[1], [0], [0], [1], [0, 0, 1, 1], [], []>} : vector<128x32xf32>, vector<32x32xf32>, vector<128x32xf32> -> vector<128x32xf32>
    %c0_3 = arith.constant 0 : index
    %c0_4 = arith.constant 0 : index
    %3 = vector.load %arg3[%c0_3, %c0_4] : memref<1x32xf32, #tpu.memory_space<vmem>>, vector<1x32xf32>
    %4 = vector.broadcast %3 : vector<1x32xf32> to vector<128x32xf32>
    %5 = arith.addf %2, %4 : vector<128x32xf32>
    %cst_5 = arith.constant 0.000000e+00 : f32
    %6 = vector.broadcast %cst_5 : f32 to vector<128x32xf32>
    %7 = arith.maximumf %5, %6 : vector<128x32xf32>
    %c0_6 = arith.constant 0 : index
    %c0_7 = arith.constant 0 : index
    %8 = vector.load %arg4[%c0_6, %c0_7] : memref<1x32xf32, #tpu.memory_space<vmem>>, vector<1x32xf32>
    %9 = vector.broadcast %8 : vector<1x32xf32> to vector<128x32xf32>
    %10 = arith.mulf %7, %9 : vector<128x32xf32>
    %cst_8 = arith.constant dense<0.000000e+00> : vector<128xf32>
    %11 = vector.multi_reduction <add>, %10, %cst_8 [1] : vector<128x32xf32> to vector<128xf32>
    %c0_9 = arith.constant 0 : index
    %12 = memref.load %arg5[%c0_9] : memref<1xf32, #tpu.memory_space<smem>>
    %13 = vector.broadcast %12 : f32 to vector<128xf32>
    %14 = arith.addf %11, %13 : vector<128xf32>
    %15 = arith.negf %14 : vector<128xf32>
    %16 = math.exp %15 : vector<128xf32>
    %cst_10 = arith.constant 1.000000e+00 : f32
    %17 = vector.broadcast %cst_10 : f32 to vector<128xf32>
    %18 = arith.addf %17, %16 : vector<128xf32>
    %19 = arith.divf %17, %18 : vector<128xf32>
    %20 = vector.shape_cast %19 : vector<128xf32> to vector<1x128xf32>
    %c0_11 = arith.constant 0 : index
    %c0_12 = arith.constant 0 : index
    %21 = vector.load %arg6[%c0_11, %c0_12] : memref<1x128xf32, #tpu.memory_space<vmem>>, vector<1x128xf32>
    tpu.vector_store %arg6[%c0_11, %c0_12], %20 {strides = array<i32>} : memref<1x128xf32, #tpu.memory_space<vmem>>, vector<1x128xf32>,
    return
  }
  func.func @transform_0(%arg0: i32) -> (i32, i32) {
    %c0_i32 = arith.constant 0 : i32
    %c0_i32_0 = arith.constant 0 : i32
    return %arg0, %c0_i32 : i32, i32
  }
  func.func @transform_1(%arg0: i32) -> (i32, i32) {
    %c0_i32 = arith.constant 0 : i32
    %c0_i32_0 = arith.constant 0 : i32
    %c0_i32_1 = arith.constant 0 : i32
    return %c0_i32, %c0_i32_0 : i32, i32
  }
  func.func @transform_2(%arg0: i32) -> (i32, i32) {
    %c0_i32 = arith.constant 0 : i32
    %c0_i32_0 = arith.constant 0 : i32
    %c0_i32_1 = arith.constant 0 : i32
    return %c0_i32, %c0_i32_0 : i32, i32
  }
  func.func @transform_3(%arg0: i32) -> (i32, i32) {
    %c0_i32 = arith.constant 0 : i32
    %c0_i32_0 = arith.constant 0 : i32
    %c0_i32_1 = arith.constant 0 : i32
    return %c0_i32, %c0_i32_0 : i32, i32
  }
  func.func @transform_4(%arg0: i32) -> i32 {
    %c0_i32 = arith.constant 0 : i32
    %c0_i32_0 = arith.constant 0 : i32
    return %c0_i32 : i32
  }
  func.func @transform_5(%arg0: i32) -> (i32, i32) {
    %c0_i32 = arith.constant 0 : i32
    %c0_i32_0 = arith.constant 0 : i32
    return %arg0, %c0_i32 : i32, i32
  }
}

</mosaic_0001>

<llo_original>
// kernel: tpu_custom_call.1
$region0: #{tpu_custom_call.1}
  #allocation0 [shape = 'u32[]', space=smem, size = 0x4, offset = 0x4, fixed_abs, tag = 'smem constant byte address 0x4 - core index']
  #allocation1 [shape = 'u32[144,128]{1,0:T(1,128)}', space=vmem, size = 0x12000, scoped, tag = 'internal scratch']
  #allocation2 [shape = 'f32[1]{0:T(128)S(6)}', space=smem, size = 0x200, scoped, tag = 'scoped memory for tpu_custom_call.1']
  %s0 = inlined_call_operand.vmem [shape: f32[128,32], index: 0, kind: input, shape index: {}]
  %s1 = inlined_call_operand.vmem [shape: f32[32,32], index: 1, kind: input, shape index: {}]
  %s2 = inlined_call_operand.vmem [shape: f32[1,32], index: 2, kind: input, shape index: {}]
  %s3 = inlined_call_operand.vmem [shape: f32[1,32], index: 3, kind: input, shape index: {}]
  %s4 = inlined_call_operand.<no memory space> [shape: f32[1], index: 4, kind: input, shape index: {}]
  %s5 = inlined_call_operand.hbm [shape: f32[1,128], index: 5, kind: output, shape index: {}]
  %s6 = sld [smem:[#allocation0]]
  $region30: #{tpu_custom_call.1} parent=0
    _
  %s8 = ssub.s32 1, %s6
  %s9 = scalar_select 0, %s8, %s6
  %10 = sst [smem:[#allocation2]] %s4
  $region1: #{tpu_custom_call.1} parent=0
    #allocation3 [shape = 'u8[512]{0}', space=vmem, size = 0x400, scoped, tag = 'output window, operand 0, single buffered']
    #allocation4 [shape = 's32[1]{0}', space=sflag, size = 0x4, scoped, tag = 'scoped memory for tpu_custom_call.1']
    %11 = vsyncpa [#allocation4], 0
    // Predicated region
    $region2: #{tpu_custom_call.1} parent=1 // pred_check
      _
    $region3: #{tpu_custom_call.1} parent=1 // pred_check_branch
      %13 = sbr.rel (0) target = $region5
    $region4: #{tpu_custom_call.1} parent=1 // pred_region
      _
    $region5: #{tpu_custom_call.1} parent=1 // pred_fallthru
      _
    // Predicated region
    $region6: #{tpu_custom_call.1} parent=1 // pred_check
      _
    $region7: #{tpu_custom_call.1} parent=1 // pred_check_branch
      %15 = sbr.rel (0) target = $region9
    $region8: #{tpu_custom_call.1} parent=1 // pred_region
      _
    $region9: #{tpu_custom_call.1} parent=1 // pred_fallthru
      _
    // Predicated region
    $region10: #{tpu_custom_call.1} parent=1 // pred_check
      _
    $region11: #{tpu_custom_call.1} parent=1 // pred_check_branch
      %17 = sbr.rel (0) target = $region13
    $region12: #{tpu_custom_call.1} parent=1 // pred_region
      _
    $region13: #{tpu_custom_call.1} parent=1 // pred_fallthru
      _
    // Predicated region
    $region14: #{tpu_custom_call.1} parent=1 // pred_check
      _
    $region15: #{tpu_custom_call.1} parent=1 // pred_check_branch
      %19 = sbr.rel (0) target = $region17
    $region16: #{tpu_custom_call.1} parent=1 // pred_region
      _
    $region17: #{tpu_custom_call.1} parent=1 // pred_fallthru
      _
    // Predicated region
    $region18: #{tpu_custom_call.1} parent=1 // pred_check
      _
    $region19: #{tpu_custom_call.1} parent=1 // pred_check_branch
      %21 = sbr.rel (0) target = $region21
    $region20: #{tpu_custom_call.1} parent=1 // pred_region
      _
    $region21: #{tpu_custom_call.1} parent=1 // pred_fallthru
      _
    %v22 = vld [vmem:[%s0] sm:$0xff]
    %v23 = vld [vmem:[%s0 + $0x8] sm:$0xff]
    %v24 = vld [vmem:[%s0 + $0x10] sm:$0xff]
    %v25 = vld [vmem:[%s0 + $0x18] sm:$0xff]
    %v26 = vld [vmem:[%s0 + $0x20] sm:$0xff]
    %v27 = vld [vmem:[%s0 + $0x28] sm:$0xff]
    %v28 = vld [vmem:[%s0 + $0x30] sm:$0xff]
    %v29 = vld [vmem:[%s0 + $0x38] sm:$0xff]
    %v30 = vld [vmem:[%s0 + $0x40] sm:$0xff]
    %v31 = vld [vmem:[%s0 + $0x48] sm:$0xff]
    %v32 = vld [vmem:[%s0 + $0x50] sm:$0xff]
    %v33 = vld [vmem:[%s0 + $0x58] sm:$0xff]
    %v34 = vld [vmem:[%s0 + $0x60] sm:$0xff]
    %v35 = vld [vmem:[%s0 + $0x68] sm:$0xff]
    %v36 = vld [vmem:[%s0 + $0x70] sm:$0xff]
    %v37 = vld [vmem:[%s0 + $0x78] sm:$0xff]
    %v38 = vld [vmem:[%s1] sm:$0xff]
    %v39 = vld [vmem:[%s1 + $0x8] sm:$0xff]
    %v40 = vld [vmem:[%s1 + $0x10] sm:$0xff]
    %v41 = vld [vmem:[%s1 + $0x18] sm:$0xff]
    %v42 = vld [vmem:[%s2] sm:$0x1]
    %v44 = vlaneseq
    %v45 = vshrl.u32 %v44, 7
    %v46 = vsub.s32 0, %v45
    %v47 = vrot.slane %v42, %v46
    %vm49 = vcmask 261120
    %v51 = vsel %vm49, %v22, 0
    %v54 = vsel %vm49, %v23, 0
    %v57 = vsel %vm49, %v24, 0
    %v60 = vsel %vm49, %v25, 0
    %v63 = vsel %vm49, %v26, 0
    %v66 = vsel %vm49, %v27, 0
    %v69 = vsel %vm49, %v28, 0
    %v72 = vsel %vm49, %v29, 0
    %v75 = vsel %vm49, %v30, 0
    %v78 = vsel %vm49, %v31, 0
    %v81 = vsel %vm49, %v32, 0
    %v84 = vsel %vm49, %v33, 0
    %v87 = vsel %vm49, %v34, 0
    %v90 = vsel %vm49, %v35, 0
    %v93 = vsel %vm49, %v36, 0
    %v96 = vsel %vm49, %v37, 0
    %98 = vmatprep.subr.mxu0 0.0
    %99 = vmatpush1.msra.mxu0 %v38
    %100 = vmatprep.subr.mxu0 0.0
    %101 = vmatpush1.msra.mxu0 %v39
    %102 = vmatprep.subr.mxu0 0.0
    %103 = vmatpush1.msra.mxu0 %v40
    %104 = vmatprep.subr.mxu0 0.0
    %105 = vmatpush1.msra.mxu0 %v41
    %106 = vmatprep.subr.mxu0 0.0
    %107 = vmatpush1.msra.mxu0 0.0
    %108 = vmatprep.subr.mxu0 0.0
    %109 = vmatpush1.msra.mxu0 0.0
    %110 = vmatprep.subr.mxu0 0.0
    %111 = vmatpush1.msra.mxu0 0.0
    %112 = vmatprep.subr.mxu0 0.0
    %113 = vmatpush1.msra.mxu0 0.0
    %114 = vmatprep.subr.mxu0 0.0
    %115 = vmatpush1.msra.mxu0 0.0
    %116 = vmatprep.subr.mxu0 0.0
    %117 = vmatpush1.msra.mxu0 0.0
    %118 = vmatprep.subr.mxu0 0.0
    %119 = vmatpush1.msra.mxu0 0.0
    %120 = vmatprep.subr.mxu0 0.0
    %121 = vmatpush1.msra.mxu0 0.0
    %122 = vmatprep.subr.mxu0 0.0
    %123 = vmatpush1.msra.mxu0 0.0
    %124 = vmatprep.subr.mxu0 0.0
    %125 = vmatpush1.msra.mxu0 0.0
    %126 = vmatprep.subr.mxu0 0.0
    %127 = vmatpush1.msra.mxu0 0.0
    %128 = vmatprep.subr.mxu0 0.0
    %129 = vmatpush1.msra.mxu0 0.0
    %130 = vmatprep.subr.mxu0 0.0
    %131 = vmatpush1.msra.mxu0 0.0
    %132 = vmatprep.subr.mxu0 0.0
    %133 = vmatpush1.msra.mxu0 0.0
    %134 = vmatprep.subr.mxu0 0.0
    %135 = vmatpush1.msra.mxu0 0.0
    %136 = vmatprep.subr.mxu0 0.0
    %137 = vmatpush1.msra.mxu0 0.0
    %138 = vmatprep.subr.mxu0 0.0
    %139 = vmatpush1.msra.mxu0 0.0
    %140 = vmatprep.subr.mxu0 0.0
    %141 = vmatpush1.msra.mxu0 0.0
    %142 = vmatprep.subr.mxu0 0.0
    %143 = vmatpush1.msra.mxu0 0.0
    %144 = vmatprep.subr.mxu0 0.0
    %145 = vmatpush1.msra.mxu0 0.0
    %146 = vmatprep.subr.mxu0 0.0
    %147 = vmatpush1.msra.mxu0 0.0
    %148 = vmatprep.subr.mxu0 0.0
    %149 = vmatpush1.msra.mxu0 0.0
    %150 = vmatprep.subr.mxu0 0.0
    %151 = vmatpush1.msra.mxu0 0.0
    %152 = vmatprep.subr.mxu0 0.0
    %153 = vmatpush1.msra.mxu0 0.0
    %154 = vmatprep.subr.mxu0 0.0
    %155 = vmatpush1.msra.mxu0 0.0
    %156 = vmatprep.subr.mxu0 0.0
    %157 = vmatpush1.msra.mxu0 0.0
    %158 = vmatprep.subr.mxu0 0.0
    %159 = vmatpush1.msra.mxu0 0.0
    %160 = vmatprep.subr.mxu0 0.0
    %161 = vmatpush1.msra.mxu0 0.0
    %162 = vmatprep.mubr.f32.mxu0 0.0
    %163 = vmatmul.mubr.f32.gmra.mrb[0].mxu0 %v51
    %v164 = vpop.f32.mrb[0].mxu0
    %v165 = vadd.f32 %v47, %v164
    %v166 = vpop.f32.mrb[0].mxu0
    %167 = vmatprep.mubr.f32.mxu0 0.0
    %168 = vmatmul.mubr.f32.gmra.mrb[0].mxu0 %v54
    %v169 = vpop.f32.mrb[0].mxu0
    %v170 = vadd.f32 %v47, %v169
    %v171 = vpop.f32.mrb[0].mxu0
    %172 = vmatprep.mubr.f32.mxu0 0.0
    %173 = vmatmul.mubr.f32.gmra.mrb[0].mxu0 %v57
    %v174 = vpop.f32.mrb[0].mxu0
    %v175 = vadd.f32 %v47, %v174
    %v176 = vpop.f32.mrb[0].mxu0
    %177 = vmatprep.mubr.f32.mxu0 0.0
    %178 = vmatmul.mubr.f32.gmra.mrb[0].mxu0 %v60
    %v179 = vpop.f32.mrb[0].mxu0
    %v180 = vadd.f32 %v47, %v179
    %v181 = vpop.f32.mrb[0].mxu0
    %182 = vmatprep.mubr.f32.mxu0 0.0
    %183 = vmatmul.mubr.f32.gmra.mrb[0].mxu0 %v63
    %v184 = vpop.f32.mrb[0].mxu0
    %v185 = vadd.f32 %v47, %v184
    %v186 = vpop.f32.mrb[0].mxu0
    %187 = vmatprep.mubr.f32.mxu0 0.0
    %188 = vmatmul.mubr.f32.gmra.mrb[0].mxu0 %v66
    %v189 = vpop.f32.mrb[0].mxu0
    %v190 = vadd.f32 %v47, %v189
    %v191 = vpop.f32.mrb[0].mxu0
    %192 = vmatprep.mubr.f32.mxu0 0.0
    %193 = vmatmul.mubr.f32.gmra.mrb[0].mxu0 %v69
    %v194 = vpop.f32.mrb[0].mxu0
    %v195 = vadd.f32 %v47, %v194
    %v196 = vpop.f32.mrb[0].mxu0
    %197 = vmatprep.mubr.f32.mxu0 0.0
    %198 = vmatmul.mubr.f32.gmra.mrb[0].mxu0 %v72
    %v199 = vpop.f32.mrb[0].mxu0
    %v200 = vadd.f32 %v47, %v199
    %v201 = vpop.f32.mrb[0].mxu0
    %202 = vmatprep.mubr.f32.mxu0 0.0
    %203 = vmatmul.mubr.f32.gmra.mrb[0].mxu0 %v75
    %v204 = vpop.f32.mrb[0].mxu0
    %v205 = vadd.f32 %v47, %v204
    %v206 = vpop.f32.mrb[0].mxu0
    %207 = vmatprep.mubr.f32.mxu0 0.0
    %208 = vmatmul.mubr.f32.gmra.mrb[0].mxu0 %v78
    %v209 = vpop.f32.mrb[0].mxu0
    %v210 = vadd.f32 %v47, %v209
    %v211 = vpop.f32.mrb[0].mxu0
    %212 = vmatprep.mubr.f32.mxu0 0.0
    %213 = vmatmul.mubr.f32.gmra.mrb[0].mxu0 %v81
    %v214 = vpop.f32.mrb[0].mxu0
    %v215 = vadd.f32 %v47, %v214
    %v216 = vpop.f32.mrb[0].mxu0
    %217 = vmatprep.mubr.f32.mxu0 0.0
    %218 = vmatmul.mubr.f32.gmra.mrb[0].mxu0 %v84
    %v219 = vpop.f32.mrb[0].mxu0
    %v220 = vadd.f32 %v47, %v219
    %v221 = vpop.f32.mrb[0].mxu0
    %222 = vmatprep.mubr.f32.mxu0 0.0
    %223 = vmatmul.mubr.f32.gmra.mrb[0].mxu0 %v87
    %v224 = vpop.f32.mrb[0].mxu0
    %v225 = vadd.f32 %v47, %v224
    %v226 = vpop.f32.mrb[0].mxu0
    %227 = vmatprep.mubr.f32.mxu0 0.0
    %228 = vmatmul.mubr.f32.gmra.mrb[0].mxu0 %v90
    %v229 = vpop.f32.mrb[0].mxu0
    %v230 = vadd.f32 %v47, %v229
    %v231 = vpop.f32.mrb[0].mxu0
    %232 = vmatprep.mubr.f32.mxu0 0.0
    %233 = vmatmul.mubr.f32.gmra.mrb[0].mxu0 %v93
    %v234 = vpop.f32.mrb[0].mxu0
    %v235 = vadd.f32 %v47, %v234
    %v236 = vpop.f32.mrb[0].mxu0
    %237 = vmatprep.mubr.f32.mxu0 0.0
    %238 = vmatmul.mubr.f32.gmra.mrb[0].mxu0 %v96
    %v239 = vpop.f32.mrb[0].mxu0
    %v240 = vadd.f32 %v47, %v239
    %v241 = vpop.f32.mrb[0].mxu0
    %242 = vdwg.mxu0
    %v243 = vmax.f32 %v165, 0.0
    %v244 = vmax.f32 %v170, 0.0
    %v245 = vmax.f32 %v175, 0.0
    %v246 = vmax.f32 %v180, 0.0
    %v247 = vmax.f32 %v185, 0.0
    %v248 = vmax.f32 %v190, 0.0
    %v249 = vmax.f32 %v195, 0.0
    %v250 = vmax.f32 %v200, 0.0
    %v251 = vmax.f32 %v205, 0.0
    %v252 = vmax.f32 %v210, 0.0
    %v253 = vmax.f32 %v215, 0.0
    %v254 = vmax.f32 %v220, 0.0
    %v255 = vmax.f32 %v225, 0.0
    %v256 = vmax.f32 %v230, 0.0
    %v257 = vmax.f32 %v235, 0.0
    %v258 = vmax.f32 %v240, 0.0
    %v259 = vld [vmem:[%s3] sm:$0x1]
    %v261 = vlaneseq
    %v262 = vshrl.u32 %v261, 7
    %v263 = vsub.s32 0, %v262
    %v264 = vrot.slane %v259, %v263
    %v266 = vmul.f32 %v243, %v264
    %v267 = vmul.f32 %v244, %v264
    %v268 = vmul.f32 %v245, %v264
    %v269 = vmul.f32 %v246, %v264
    %v270 = vmul.f32 %v247, %v264
    %v271 = vmul.f32 %v248, %v264
    %v272 = vmul.f32 %v249, %v264
    %v273 = vmul.f32 %v250, %v264
    %v274 = vmul.f32 %v251, %v264
    %v275 = vmul.f32 %v252, %v264
    %v276 = vmul.f32 %v253, %v264
    %v277 = vmul.f32 %v254, %v264
    %v278 = vmul.f32 %v255, %v264
    %v279 = vmul.f32 %v256, %v264
    %v280 = vmul.f32 %v257, %v264
    %v281 = vmul.f32 %v258, %v264
    %v282 = vsel %vm49, %v266, 0.0
    %283 = vadd.xlane.f32.xlu0 %v282
    %v284 = vpop.xlane.xlu0 %283
    %v285 = vsel %vm49, %v267, 0.0
    %286 = vadd.xlane.f32.xlu0 %v285
    %v287 = vpop.xlane.xlu0 %286
    %v288 = vsel %vm49, %v268, 0.0
    %289 = vadd.xlane.f32.xlu0 %v288
    %v290 = vpop.xlane.xlu0 %289
    %v291 = vsel %vm49, %v269, 0.0
    %292 = vadd.xlane.f32.xlu0 %v291
    %v293 = vpop.xlane.xlu0 %292
    %v294 = vsel %vm49, %v270, 0.0
    %295 = vadd.xlane.f32.xlu0 %v294
    %v296 = vpop.xlane.xlu0 %295
    %v297 = vsel %vm49, %v271, 0.0
    %298 = vadd.xlane.f32.xlu0 %v297
    %v299 = vpop.xlane.xlu0 %298
    %v300 = vsel %vm49, %v272, 0.0
    %301 = vadd.xlane.f32.xlu0 %v300
    %v302 = vpop.xlane.xlu0 %301
    %v303 = vsel %vm49, %v273, 0.0
    %304 = vadd.xlane.f32.xlu0 %v303
    %v305 = vpop.xlane.xlu0 %304
    %v306 = vsel %vm49, %v274, 0.0
    %307 = vadd.xlane.f32.xlu0 %v306
    %v308 = vpop.xlane.xlu0 %307
    %v309 = vsel %vm49, %v275, 0.0
    %310 = vadd.xlane.f32.xlu0 %v309
    %v311 = vpop.xlane.xlu0 %310
    %v312 = vsel %vm49, %v276, 0.0
    %313 = vadd.xlane.f32.xlu0 %v312
    %v314 = vpop.xlane.xlu0 %313
    %v315 = vsel %vm49, %v277, 0.0
    %316 = vadd.xlane.f32.xlu0 %v315
    %v317 = vpop.xlane.xlu0 %316
    %v318 = vsel %vm49, %v278, 0.0
    %319 = vadd.xlane.f32.xlu0 %v318
    %v320 = vpop.xlane.xlu0 %319
    %v321 = vsel %vm49, %v279, 0.0
    %322 = vadd.xlane.f32.xlu0 %v321
    %v323 = vpop.xlane.xlu0 %322
    %v324 = vsel %vm49, %v280, 0.0
    %325 = vadd.xlane.f32.xlu0 %v324
    %v326 = vpop.xlane.xlu0 %325
    %v327 = vsel %vm49, %v281, 0.0
    %328 = vadd.xlane.f32.xlu0 %v327
    %v329 = vpop.xlane.xlu0 %328
    %s330 = sld [smem:[#allocation2]]
    %v331 = vstv %s330
    %v332 = vadd.f32 %v284, %v331
    %v333 = vadd.f32 %v287, %v331
    %v334 = vadd.f32 %v290, %v331
    %v335 = vadd.f32 %v293, %v331
    %v336 = vadd.f32 %v296, %v331
    %v337 = vadd.f32 %v299, %v331
    %v338 = vadd.f32 %v302, %v331
    %v339 = vadd.f32 %v305, %v331
    %v340 = vadd.f32 %v308, %v331
    %v341 = vadd.f32 %v311, %v331
    %v342 = vadd.f32 %v314, %v331
    %v343 = vadd.f32 %v317, %v331
    %v344 = vadd.f32 %v320, %v331
    %v345 = vadd.f32 %v323, %v331
    %v346 = vadd.f32 %v326, %v331
    %v347 = vadd.f32 %v329, %v331
    %v348 = vxor.u32 %v332, 2147483648
    %v349 = vxor.u32 %v333, 2147483648
    %v350 = vxor.u32 %v334, 2147483648
    %v351 = vxor.u32 %v335, 2147483648
    %v352 = vxor.u32 %v336, 2147483648
    %v353 = vxor.u32 %v337, 2147483648
    %v354 = vxor.u32 %v338, 2147483648
    %v355 = vxor.u32 %v339, 2147483648
    %v356 = vxor.u32 %v340, 2147483648
    %v357 = vxor.u32 %v341, 2147483648
    %v358 = vxor.u32 %v342, 2147483648
    %v359 = vxor.u32 %v343, 2147483648
    %v360 = vxor.u32 %v344, 2147483648
    %v361 = vxor.u32 %v345, 2147483648
    %v362 = vxor.u32 %v346, 2147483648
    %v363 = vxor.u32 %v347, 2147483648
    %v364 = vmul.f32 %v348, 1.442695
    %v365 = vpow.pop %v364
    %v366 = vmul.f32 %v349, 1.442695
    %v367 = vpow.pop %v366
    %v368 = vmul.f32 %v350, 1.442695
    %v369 = vpow.pop %v368
    %v370 = vmul.f32 %v351, 1.442695
    %v371 = vpow.pop %v370
    %v372 = vmul.f32 %v352, 1.442695
    %v373 = vpow.pop %v372
    %v374 = vmul.f32 %v353, 1.442695
    %v375 = vpow.pop %v374
    %v376 = vmul.f32 %v354, 1.442695
    %v377 = vpow.pop %v376
    %v378 = vmul.f32 %v355, 1.442695
    %v379 = vpow.pop %v378
    %v380 = vmul.f32 %v356, 1.442695
    %v381 = vpow.pop %v380
    %v382 = vmul.f32 %v357, 1.442695
    %v383 = vpow.pop %v382
    %v384 = vmul.f32 %v358, 1.442695
    %v385 = vpow.pop %v384
    %v386 = vmul.f32 %v359, 1.442695
    %v387 = vpow.pop %v386
    %v388 = vmul.f32 %v360, 1.442695
    %v389 = vpow.pop %v388
    %v390 = vmul.f32 %v361, 1.442695
    %v391 = vpow.pop %v390
    %v392 = vmul.f32 %v362, 1.442695
    %v393 = vpow.pop %v392
    %v394 = vmul.f32 %v363, 1.442695
    %v395 = vpow.pop %v394
    %v396 = vadd.f32 %v365, 1.0
    %v397 = vadd.f32 %v367, 1.0
    %v398 = vadd.f32 %v369, 1.0
    %v399 = vadd.f32 %v371, 1.0
    %v400 = vadd.f32 %v373, 1.0
    %v401 = vadd.f32 %v375, 1.0
    %v402 = vadd.f32 %v377, 1.0
    %v403 = vadd.f32 %v379, 1.0
    %v404 = vadd.f32 %v381, 1.0
    %v405 = vadd.f32 %v383, 1.0
    %v406 = vadd.f32 %v385, 1.0
    %v407 = vadd.f32 %v387, 1.0
    %v408 = vadd.f32 %v389, 1.0
    %v409 = vadd.f32 %v391, 1.0
    %v410 = vadd.f32 %v393, 1.0
    %v411 = vadd.f32 %v395, 1.0
    %v412 = vrcp.pop %v396
    %v413 = vmul.f32 1.0, %v412
    %v414 = vrcp.pop %v397
    %v415 = vmul.f32 1.0, %v414
    %v416 = vrcp.pop %v398
    %v417 = vmul.f32 1.0, %v416
    %v418 = vrcp.pop %v399
    %v419 = vmul.f32 1.0, %v418
    %v420 = vrcp.pop %v400
    %v421 = vmul.f32 1.0, %v420
    %v422 = vrcp.pop %v401
    %v423 = vmul.f32 1.0, %v422
    %v424 = vrcp.pop %v402
    %v425 = vmul.f32 1.0, %v424
    %v426 = vrcp.pop %v403
    %v427 = vmul.f32 1.0, %v426
    %v428 = vrcp.pop %v404
    %v429 = vmul.f32 1.0, %v428
    %v430 = vrcp.pop %v405
    %v431 = vmul.f32 1.0, %v430
    %v432 = vrcp.pop %v406
    %v433 = vmul.f32 1.0, %v432
    %v434 = vrcp.pop %v407
    %v435 = vmul.f32 1.0, %v434
    %v436 = vrcp.pop %v408
    %v437 = vmul.f32 1.0, %v436
    %v438 = vrcp.pop %v409
    %v439 = vmul.f32 1.0, %v438
    %v440 = vrcp.pop %v410
    %v441 = vmul.f32 1.0, %v440
    %v442 = vrcp.pop %v411
    %v443 = vmul.f32 1.0, %v442
    %v460 = vlaneseq
    %v461 = vand.u32 %v460, 127
    %v462 = vlaneseq
    %v463 = vshrl.u32 %v462, 7
    %v464 = vsub.s32 %v461, %v463
    %v465 = vrot.slane %v413, %v464
    %v466 = vadd.s32 %v461, 4294967288
    %v467 = vlaneseq
    %v468 = vshrl.u32 %v467, 7
    %v469 = vsub.s32 %v466, %v468
    %v470 = vrot.slane %v415, %v469
    %vm471 = vcmask 130112
    %v472 = vsel %vm471, %v470, %v465
    %v473 = vadd.s32 %v461, 4294967280
    %v474 = vlaneseq
    %v475 = vshrl.u32 %v474, 7
    %v476 = vsub.s32 %v473, %v475
    %v477 = vrot.slane %v417, %v476
    %vm478 = vcmask 195712
    %v479 = vsel %vm478, %v477, %v472
    %v480 = vadd.s32 %v461, 4294967272
    %v481 = vlaneseq
    %v482 = vshrl.u32 %v481, 7
    %v483 = vsub.s32 %v480, %v482
    %v484 = vrot.slane %v419, %v483
    %vm485 = vcmask 261312
    %v486 = vsel %vm485, %v484, %v479
    %v487 = vadd.s32 %v461, 4294967264
    %v488 = vlaneseq
    %v489 = vshrl.u32 %v488, 7
    %v490 = vsub.s32 %v487, %v489
    %v491 = vrot.slane %v421, %v490
    %vm492 = vcmask 326912
    %v493 = vsel %vm492, %v491, %v486
    %v494 = vadd.s32 %v461, 4294967256
    %v495 = vlaneseq
    %v496 = vshrl.u32 %v495, 7
    %v497 = vsub.s32 %v494, %v496
    %v498 = vrot.slane %v423, %v497
    %vm499 = vcmask 392512
    %v500 = vsel %vm499, %v498, %v493
    %v501 = vadd.s32 %v461, 4294967248
    %v502 = vlaneseq
    %v503 = vshrl.u32 %v502, 7
    %v504 = vsub.s32 %v501, %v503
    %v505 = vrot.slane %v425, %v504
    %vm506 = vcmask 458112
    %v507 = vsel %vm506, %v505, %v500
    %v508 = vadd.s32 %v461, 4294967240
    %v509 = vlaneseq
    %v510 = vshrl.u32 %v509, 7
    %v511 = vsub.s32 %v508, %v510
    %v512 = vrot.slane %v427, %v511
    %vm513 = vcmask 523712
    %v514 = vsel %vm513, %v512, %v507
    %v515 = vadd.s32 %v461, 4294967232
    %v516 = vlaneseq
    %v517 = vshrl.u32 %v516, 7
    %v518 = vsub.s32 %v515, %v517
    %v519 = vrot.slane %v429, %v518
    %vm520 = vcmask 589312
    %v521 = vsel %vm520, %v519, %v514
    %v522 = vadd.s32 %v461, 4294967224
    %v523 = vlaneseq
    %v524 = vshrl.u32 %v523, 7
    %v525 = vsub.s32 %v522, %v524
    %v526 = vrot.slane %v431, %v525
    %vm527 = vcmask 654912
    %v528 = vsel %vm527, %v526, %v521
    %v529 = vadd.s32 %v461, 4294967216
    %v530 = vlaneseq
    %v531 = vshrl.u32 %v530, 7
    %v532 = vsub.s32 %v529, %v531
    %v533 = vrot.slane %v433, %v532
    %vm534 = vcmask 720512
    %v535 = vsel %vm534, %v533, %v528
    %v536 = vadd.s32 %v461, 4294967208
    %v537 = vlaneseq
    %v538 = vshrl.u32 %v537, 7
    %v539 = vsub.s32 %v536, %v538
    %v540 = vrot.slane %v435, %v539
    %vm541 = vcmask 786112
    %v542 = vsel %vm541, %v540, %v535
    %v543 = vadd.s32 %v461, 4294967200
    %v544 = vlaneseq
    %v545 = vshrl.u32 %v544, 7
    %v546 = vsub.s32 %v543, %v545
    %v547 = vrot.slane %v437, %v546
    %vm548 = vcmask 851712
    %v549 = vsel %vm548, %v547, %v542
    %v550 = vadd.s32 %v461, 4294967192
    %v551 = vlaneseq
    %v552 = vshrl.u32 %v551, 7
    %v553 = vsub.s32 %v550, %v552
    %v554 = vrot.slane %v439, %v553
    %vm555 = vcmask 917312
    %v556 = vsel %vm555, %v554, %v549
    %v557 = vadd.s32 %v461, 4294967184
    %v558 = vlaneseq
    %v559 = vshrl.u32 %v558, 7
    %v560 = vsub.s32 %v557, %v559
    %v561 = vrot.slane %v441, %v560
    %vm562 = vcmask 982912
    %v563 = vsel %vm562, %v561, %v556
    %v564 = vadd.s32 %v461, 4294967176
    %v565 = vlaneseq
    %v566 = vshrl.u32 %v565, 7
    %v567 = vsub.s32 %v564, %v566
    %v568 = vrot.slane %v443, %v567
    %vm569 = vcmask 1048512
    %v570 = vsel %vm569, %v568, %v563
    %572 = vst [vmem:[#allocation3] sm:$0x1] %v570
    // Predicated region
    $region22: #{tpu_custom_call.1} parent=1 // pred_check
      _
    $region23: #{tpu_custom_call.1} parent=1 // pred_check_branch
      %574 = sbr.rel (0) target = $region25
    $region24: #{tpu_custom_call.1} parent=1 // pred_region
      %s576 = ssub.s32 16, 16
      %577 = vsyncadd [#allocation4], %s576
      %s579 = sshll.u32 [#allocation3], 4
      %s580 = int_to_ptr.vmem [resolvable:$true] %s579
      %582 = dma.vmem_to_hbm [thread:$0]  %s580, 16, %s5, [#allocation4]
    $region25: #{tpu_custom_call.1} parent=1 // pred_fallthru
      _
    // Predicated region
    $region26: #{tpu_custom_call.1} parent=1 // pred_check
      _
    $region27: #{tpu_custom_call.1} parent=1 // pred_check_branch
      %584 = sbr.rel (0) target = $region29
    $region28: #{tpu_custom_call.1} parent=1 // pred_region
      %585 = dma.done [#allocation4], 16
    $region29: #{tpu_custom_call.1} parent=1 // pred_fallthru
      _
    %586 = vsyncpa [#allocation4], 1

</llo_original>
